<compile_context>
chip_gen: v6e
topology: v6e:2x2x1
jax: 0.10.0
libtpu: 0.0.40
codegen_flags: <defaults>
</compile_context>

<pallas_src>
import jax
import jax.numpy as jnp
from jax.experimental import pallas as pl
from jax.experimental.pallas import tpu as pltpu


def _reg_l1_kernel(ind_ref, feat_ref, mask_ref, target_ref, loss_ref, pred_buf):
    """Grid = (B,).

    ind_ref:    SMEM (B, K) int32          (scalar prefetch; K = real #indices)
    feat_ref:   VMEM (1, H*W, C)           per-batch NHWC slab (auto-DMA'd, pipelined)
    mask_ref:   VMEM (1, Kp, 1) f32
    target_ref: VMEM (1, Kp, C)
    loss_ref:   VMEM (1, 1, 128) f32 out   per-batch partial |.|-sum (lane-dense store)
    pred_buf:   VMEM (Kp, C) scratch, feat dtype
    """
    b = pl.program_id(0)
    K = ind_ref.shape[1]

    # Zero-init so padded rows [K, Kp) contribute exactly 0 (stale VMEM could hold
    # NaN and 0 * NaN = NaN even though their mask is 0).
    pred_buf[...] = jnp.zeros_like(pred_buf)

    # In-VMEM gather: K dynamic-sublane row reads from the slab, static-row writes.
    # Static unroll keeps store offsets static; only the read offset is dynamic,
    # and each ind_ref[b, k] is read exactly once (no waits -> no sst->sld breaks).
    # TODO(synk): for production K (128-500) switch to a chunked fori_loop(unroll=True).
    for k in range(K):
        idx = ind_ref[b, k]
        pred_buf[pl.ds(k, 1), :] = feat_ref[0, pl.ds(idx, 1), :]

    pred = pred_buf[...].astype(jnp.float32)       # (Kp, C)
    tgt = target_ref[0].astype(jnp.float32)        # (Kp, C)
    m = mask_ref[0].astype(jnp.float32)            # (Kp, 1)

    # mask is non-negative (0/1), so m*|p - t| == |m*p - m*t|.
    loss_b = jnp.sum(m * jnp.abs(pred - tgt))

    # Full-block (unmasked) lane-dense store of the per-batch partial.
    loss_ref[...] = jnp.full(loss_ref.shape, loss_b, dtype=jnp.float32)


def reg_l1_loss(output, mask, ind, target):
    """output: (B, C, H, W); mask: (B, K); ind: (B, K) int; target: (B, K, C)."""
    B, C, H, W = output.shape
    K = ind.shape[1]
    HW = H * W

    # NHWC view — the same permute(0,2,3,1).contiguous() the PyTorch reference does.
    # This puts the gather axis (H*W) on the sublane dim of the VMEM slab so the
    # in-kernel gather is a plain dynamic-sublane slice.
    feat = jnp.transpose(output, (0, 2, 3, 1)).reshape(B, HW, C)

    # Pad K to a sublane-aligned multiple of 8 (K lives on the sublane axis now);
    # padded entries have mask = 0 and therefore contribute 0.
    pad = (-K) % 8
    Kp = K + pad
    mask_p = jnp.pad(mask.astype(jnp.float32), ((0, 0), (0, pad))).reshape(B, Kp, 1)
    target_p = jnp.pad(target, ((0, 0), (0, pad), (0, 0)))

    # Clamp indices: out-of-range / sentinel values must not read out of bounds.
    ind = jnp.clip(ind.astype(jnp.int32), 0, HW - 1)

    grid_spec = pltpu.PrefetchScalarGridSpec(
        num_scalar_prefetch=1,                     # ind -> SMEM, read by the gather
        grid=(B,),
        in_specs=[
            # One contiguous per-batch slab; Pallas double-buffers it across batches.
            # TODO(synk): for large H*W (e.g. 128x128 maps) tile this along H*W with
            # an inner "arbitrary" grid axis to respect v7x (64 MiB) / v5e VMEM budgets.
            pl.BlockSpec((1, HW, C), lambda b, ind_ref: (b, 0, 0)),   # feat slab
            pl.BlockSpec((1, Kp, 1), lambda b, ind_ref: (b, 0, 0)),   # mask
            pl.BlockSpec((1, Kp, C), lambda b, ind_ref: (b, 0, 0)),   # target
        ],
        out_specs=pl.BlockSpec((1, 1, 128), lambda b, ind_ref: (b, 0, 0)),
        scratch_shapes=[
            pltpu.VMEM((Kp, C), output.dtype),     # gathered pred rows (native dtype)
        ],
    )

    loss_parts = pl.pallas_call(
        _reg_l1_kernel,
        out_shape=jax.ShapeDtypeStruct((B, 1, 128), jnp.float32),
        grid_spec=grid_spec,
        compiler_params=pltpu.CompilerParams(
            # Batches are independent -> both TensorCores on v7x.
            # TODO(synk): if B == 1 in production, add a parallel split over H*W chunks.
            dimension_semantics=("parallel",)),
    )(ind, feat, mask_p, target_p)

    loss_sum = jnp.sum(loss_parts[:, 0, 0])
    # The denominator (sum of the mask expanded to (B,K,C) == sum(mask) * C) does not
    # depend on the gather at all, so it stays in the wrapper.
    mask_sum = jnp.sum(mask.astype(jnp.float32)) * C
    return loss_sum / (mask_sum + 1e-4)


def _reg_l1_loss_ref(output, mask, ind, target):
    """Pure-JAX reference mirroring the PyTorch forward."""
    B, C, H, W = output.shape
    feat = jnp.transpose(output, (0, 2, 3, 1)).reshape(B, H * W, C)
    pred = jnp.take_along_axis(feat, ind[:, :, None].astype(jnp.int32), axis=1)
    m = jnp.broadcast_to(mask[:, :, None].astype(jnp.float32), pred.shape)
    loss = jnp.sum(jnp.abs(pred * m - target * m))
    return loss / (jnp.sum(m) + 1e-4)


if __name__ == "__main__":
    B, C, H, W, K = 2, 4, 16, 16, 8
    key = jax.random.PRNGKey(0)
    k1, k2, k3, k4 = jax.random.split(key, 4)

    output = jax.random.normal(k1, (B, C, H, W), dtype=jnp.float32)
    ind = jax.random.randint(k2, (B, K), 0, H * W, dtype=jnp.int32)
    mask = (jax.random.uniform(k3, (B, K)) > 0.3).astype(jnp.float32)
    target = jax.random.normal(k4, (B, K, C), dtype=jnp.float32)

    loss = reg_l1_loss(output, mask, ind, target)
    loss = jax.block_until_ready(loss)

    ref = _reg_l1_loss_ref(output, mask, ind, target)
    assert jnp.allclose(loss, ref, rtol=1e-5, atol=1e-5), (loss, ref)
    print("KERNEL_OK")
</pallas_src>

<mosaic_0001>
module attributes {stable_mosaic.version = 11 : i64} {
  func.func @_reg_l1_kernel(%arg0: i32, %arg1: memref<2x8xi32, #tpu.memory_space<smem>>, %arg2: memref<1x256x4xf32, #tpu.memory_space<vmem>>, %arg3: memref<1x8x1xf32, #tpu.memory_space<vmem>>, %arg4: memref<1x8x4xf32, #tpu.memory_space<vmem>>, %arg5: memref<1x1x128xf32, #tpu.memory_space<vmem>>, %arg6: memref<8x4xf32, #tpu.memory_space<vmem>>) attributes {dimension_semantics = [#tpu.dimension_semantics<parallel>], iteration_bounds = array<i64: 2>, scalar_prefetch = 1 : i64, scratch_operands = 1 : i64, tpu.core_type = #tpu.core_type<tc>, window_params = [{transform_indices = @transform_0, window_bounds = array<i64: 1, 256, 4>}, {transform_indices = @transform_1, window_bounds = array<i64: 1, 8, 1>}, {transform_indices = @transform_2, window_bounds = array<i64: 1, 8, 4>}, {transform_indices = @transform_3, window_bounds = array<i64: 1, 1, 128>}]} {
    %cst = arith.constant 0.000000e+00 : f32
    %0 = vector.broadcast %cst : f32 to vector<8x4xf32>
    %c0 = arith.constant 0 : index
    %c0_0 = arith.constant 0 : index
    %1 = vector.load %arg6[%c0, %c0_0] : memref<8x4xf32, #tpu.memory_space<vmem>>, vector<8x4xf32>
    tpu.vector_store %arg6[%c0, %c0_0], %0 {strides = array<i32>} : memref<8x4xf32, #tpu.memory_space<vmem>>, vector<8x4xf32>,
    %2 = arith.index_cast %arg0 : i32 to index
    %c0_1 = arith.constant 0 : index
    %3 = memref.load %arg1[%2, %c0_1] : memref<2x8xi32, #tpu.memory_space<smem>>
    %c0_2 = arith.constant 0 : index
    %4 = arith.index_cast %3 : i32 to index
    %c0_3 = arith.constant 0 : index
    %5 = vector.load %arg2[%c0_2, %4, %c0_3] : memref<1x256x4xf32, #tpu.memory_space<vmem>>, vector<1x1x4xf32>
    %6 = vector.shape_cast %5 : vector<1x1x4xf32> to vector<1x4xf32>
    %c0_4 = arith.constant 0 : index
    %c0_5 = arith.constant 0 : index
    %7 = vector.load %arg6[%c0_4, %c0_5] : memref<8x4xf32, #tpu.memory_space<vmem>>, vector<1x4xf32>
    tpu.vector_store %arg6[%c0_4, %c0_5], %6 {strides = array<i32>} : memref<8x4xf32, #tpu.memory_space<vmem>>, vector<1x4xf32>,
    %8 = arith.index_cast %arg0 : i32 to index
    %c1 = arith.constant 1 : index
    %9 = memref.load %arg1[%8, %c1] : memref<2x8xi32, #tpu.memory_space<smem>>
    %c0_6 = arith.constant 0 : index
    %10 = arith.index_cast %9 : i32 to index
    %c0_7 = arith.constant 0 : index
    %11 = vector.load %arg2[%c0_6, %10, %c0_7] : memref<1x256x4xf32, #tpu.memory_space<vmem>>, vector<1x1x4xf32>
    %12 = vector.shape_cast %11 : vector<1x1x4xf32> to vector<1x4xf32>
    %c1_8 = arith.constant 1 : index
    %c0_9 = arith.constant 0 : index
    %13 = vector.load %arg6[%c1_8, %c0_9] : memref<8x4xf32, #tpu.memory_space<vmem>>, vector<1x4xf32>
    tpu.vector_store %arg6[%c1_8, %c0_9], %12 {strides = array<i32>} : memref<8x4xf32, #tpu.memory_space<vmem>>, vector<1x4xf32>,
    %14 = arith.index_cast %arg0 : i32 to index
    %c2 = arith.constant 2 : index
    %15 = memref.load %arg1[%14, %c2] : memref<2x8xi32, #tpu.memory_space<smem>>
    %c0_10 = arith.constant 0 : index
    %16 = arith.index_cast %15 : i32 to index
    %c0_11 = arith.constant 0 : index
    %17 = vector.load %arg2[%c0_10, %16, %c0_11] : memref<1x256x4xf32, #tpu.memory_space<vmem>>, vector<1x1x4xf32>
    %18 = vector.shape_cast %17 : vector<1x1x4xf32> to vector<1x4xf32>
    %c2_12 = arith.constant 2 : index
    %c0_13 = arith.constant 0 : index
    %19 = vector.load %arg6[%c2_12, %c0_13] : memref<8x4xf32, #tpu.memory_space<vmem>>, vector<1x4xf32>
    tpu.vector_store %arg6[%c2_12, %c0_13], %18 {strides = array<i32>} : memref<8x4xf32, #tpu.memory_space<vmem>>, vector<1x4xf32>,
    %20 = arith.index_cast %arg0 : i32 to index
    %c3 = arith.constant 3 : index
    %21 = memref.load %arg1[%20, %c3] : memref<2x8xi32, #tpu.memory_space<smem>>
    %c0_14 = arith.constant 0 : index
    %22 = arith.index_cast %21 : i32 to index
    %c0_15 = arith.constant 0 : index
    %23 = vector.load %arg2[%c0_14, %22, %c0_15] : memref<1x256x4xf32, #tpu.memory_space<vmem>>, vector<1x1x4xf32>
    %24 = vector.shape_cast %23 : vector<1x1x4xf32> to vector<1x4xf32>
    %c3_16 = arith.constant 3 : index
    %c0_17 = arith.constant 0 : index
    %25 = vector.load %arg6[%c3_16, %c0_17] : memref<8x4xf32, #tpu.memory_space<vmem>>, vector<1x4xf32>
    tpu.vector_store %arg6[%c3_16, %c0_17], %24 {strides = array<i32>} : memref<8x4xf32, #tpu.memory_space<vmem>>, vector<1x4xf32>,
    %26 = arith.index_cast %arg0 : i32 to index
    %c4 = arith.constant 4 : index
    %27 = memref.load %arg1[%26, %c4] : memref<2x8xi32, #tpu.memory_space<smem>>
    %c0_18 = arith.constant 0 : index
    %28 = arith.index_cast %27 : i32 to index
    %c0_19 = arith.constant 0 : index
    %29 = vector.load %arg2[%c0_18, %28, %c0_19] : memref<1x256x4xf32, #tpu.memory_space<vmem>>, vector<1x1x4xf32>
    %30 = vector.shape_cast %29 : vector<1x1x4xf32> to vector<1x4xf32>
    %c4_20 = arith.constant 4 : index
    %c0_21 = arith.constant 0 : index
    %31 = vector.load %arg6[%c4_20, %c0_21] : memref<8x4xf32, #tpu.memory_space<vmem>>, vector<1x4xf32>
    tpu.vector_store %arg6[%c4_20, %c0_21], %30 {strides = array<i32>} : memref<8x4xf32, #tpu.memory_space<vmem>>, vector<1x4xf32>,
    %32 = arith.index_cast %arg0 : i32 to index
    %c5 = arith.constant 5 : index
    %33 = memref.load %arg1[%32, %c5] : memref<2x8xi32, #tpu.memory_space<smem>>
    %c0_22 = arith.constant 0 : index
    %34 = arith.index_cast %33 : i32 to index
    %c0_23 = arith.constant 0 : index
    %35 = vector.load %arg2[%c0_22, %34, %c0_23] : memref<1x256x4xf32, #tpu.memory_space<vmem>>, vector<1x1x4xf32>
    %36 = vector.shape_cast %35 : vector<1x1x4xf32> to vector<1x4xf32>
    %c5_24 = arith.constant 5 : index
    %c0_25 = arith.constant 0 : index
    %37 = vector.load %arg6[%c5_24, %c0_25] : memref<8x4xf32, #tpu.memory_space<vmem>>, vector<1x4xf32>
    tpu.vector_store %arg6[%c5_24, %c0_25], %36 {strides = array<i32>} : memref<8x4xf32, #tpu.memory_space<vmem>>, vector<1x4xf32>,
    %38 = arith.index_cast %arg0 : i32 to index
    %c6 = arith.constant 6 : index
    %39 = memref.load %arg1[%38, %c6] : memref<2x8xi32, #tpu.memory_space<smem>>
    %c0_26 = arith.constant 0 : index
    %40 = arith.index_cast %39 : i32 to index
    %c0_27 = arith.constant 0 : index
    %41 = vector.load %arg2[%c0_26, %40, %c0_27] : memref<1x256x4xf32, #tpu.memory_space<vmem>>, vector<1x1x4xf32>
    %42 = vector.shape_cast %41 : vector<1x1x4xf32> to vector<1x4xf32>
    %c6_28 = arith.constant 6 : index
    %c0_29 = arith.constant 0 : index
    %43 = vector.load %arg6[%c6_28, %c0_29] : memref<8x4xf32, #tpu.memory_space<vmem>>, vector<1x4xf32>
    tpu.vector_store %arg6[%c6_28, %c0_29], %42 {strides = array<i32>} : memref<8x4xf32, #tpu.memory_space<vmem>>, vector<1x4xf32>,
    %44 = arith.index_cast %arg0 : i32 to index
    %c7 = arith.constant 7 : index
    %45 = memref.load %arg1[%44, %c7] : memref<2x8xi32, #tpu.memory_space<smem>>
    %c0_30 = arith.constant 0 : index
    %46 = arith.index_cast %45 : i32 to index
    %c0_31 = arith.constant 0 : index
    %47 = vector.load %arg2[%c0_30, %46, %c0_31] : memref<1x256x4xf32, #tpu.memory_space<vmem>>, vector<1x1x4xf32>
    %48 = vector.shape_cast %47 : vector<1x1x4xf32> to vector<1x4xf32>
    %c7_32 = arith.constant 7 : index
    %c0_33 = arith.constant 0 : index
    %49 = vector.load %arg6[%c7_32, %c0_33] : memref<8x4xf32, #tpu.memory_space<vmem>>, vector<1x4xf32>
    tpu.vector_store %arg6[%c7_32, %c0_33], %48 {strides = array<i32>} : memref<8x4xf32, #tpu.memory_space<vmem>>, vector<1x4xf32>,
    %c0_34 = arith.constant 0 : index
    %c0_35 = arith.constant 0 : index
    %50 = vector.load %arg6[%c0_34, %c0_35] : memref<8x4xf32, #tpu.memory_space<vmem>>, vector<8x4xf32>
    %c0_36 = arith.constant 0 : index
    %c0_37 = arith.constant 0 : index
    %c0_38 = arith.constant 0 : index
    %51 = vector.load %arg4[%c0_36, %c0_37, %c0_38] : memref<1x8x4xf32, #tpu.memory_space<vmem>>, vector<1x8x4xf32>
    %52 = vector.shape_cast %51 : vector<1x8x4xf32> to vector<8x4xf32>
    %c0_39 = arith.constant 0 : index
    %c0_40 = arith.constant 0 : index
    %c0_41 = arith.constant 0 : index
    %53 = vector.load %arg3[%c0_39, %c0_40, %c0_41] : memref<1x8x1xf32, #tpu.memory_space<vmem>>, vector<1x8x1xf32>
    %54 = vector.shape_cast %53 : vector<1x8x1xf32> to vector<8x1xf32>
    %55 = arith.subf %50, %52 : vector<8x4xf32>
    %56 = math.absf %55 : vector<8x4xf32>
    %57 = vector.broadcast %54 : vector<8x1xf32> to vector<8x4xf32>
    %58 = arith.mulf %57, %56 : vector<8x4xf32>
    %59 = vector.shape_cast %58 : vector<8x4xf32> to vector<1x8x4xf32>
    %cst_42 = arith.constant dense<0.000000e+00> : vector<1xf32>
    %60 = vector.multi_reduction <add>, %59, %cst_42 [1, 2] : vector<1x8x4xf32> to vector<1xf32>
    %61 = vector.shape_cast %60 : vector<1xf32> to vector<1x1x1xf32>
    %62 = vector.extract %61[0, 0, 0] : f32 from vector<1x1x1xf32>
    %63 = vector.broadcast %62 : f32 to vector<1x1x128xf32>
    %c0_43 = arith.constant 0 : index
    %c0_44 = arith.constant 0 : index
    %c0_45 = arith.constant 0 : index
    %64 = vector.load %arg5[%c0_43, %c0_44, %c0_45] : memref<1x1x128xf32, #tpu.memory_space<vmem>>, vector<1x1x128xf32>
    tpu.vector_store %arg5[%c0_43, %c0_44, %c0_45], %63 {strides = array<i32>} : memref<1x1x128xf32, #tpu.memory_space<vmem>>, vector<1x1x128xf32>,
    return
  }
  func.func @transform_0(%arg0: i32, %arg1: memref<2x8xi32, #tpu.memory_space<smem>>) -> (i32, i32, i32) {
    %c0_i32 = arith.constant 0 : i32
    %c0_i32_0 = arith.constant 0 : i32
    %c0_i32_1 = arith.constant 0 : i32
    return %arg0, %c0_i32, %c0_i32_0 : i32, i32, i32
  }
  func.func @transform_1(%arg0: i32, %arg1: memref<2x8xi32, #tpu.memory_space<smem>>) -> (i32, i32, i32) {
    %c0_i32 = arith.constant 0 : i32
    %c0_i32_0 = arith.constant 0 : i32
    %c0_i32_1 = arith.constant 0 : i32
    return %arg0, %c0_i32, %c0_i32_0 : i32, i32, i32
  }
  func.func @transform_2(%arg0: i32, %arg1: memref<2x8xi32, #tpu.memory_space<smem>>) -> (i32, i32, i32) {
    %c0_i32 = arith.constant 0 : i32
    %c0_i32_0 = arith.constant 0 : i32
    %c0_i32_1 = arith.constant 0 : i32
    return %arg0, %c0_i32, %c0_i32_0 : i32, i32, i32
  }
  func.func @transform_3(%arg0: i32, %arg1: memref<2x8xi32, #tpu.memory_space<smem>>) -> (i32, i32, i32) {
    %c0_i32 = arith.constant 0 : i32
    %c0_i32_0 = arith.constant 0 : i32
    %c0_i32_1 = arith.constant 0 : i32
    return %arg0, %c0_i32, %c0_i32_0 : i32, i32, i32
  }
}

</mosaic_0001>

<llo_original>
// kernel: tpu_custom_call.1
$region0: #{tpu_custom_call.1}
  #allocation0 [shape = 'u32[]', space=smem, size = 0x4, offset = 0x4, fixed_abs, tag = 'smem constant byte address 0x4 - core index']
  #allocation1 [shape = 'u32[144,128]{1,0:T(1,128)}', space=vmem, size = 0x12000, scoped, tag = 'internal scratch']
  #allocation2 [shape = 'f32[8,4]{1,0:T(8,128)}', space=vmem, size = 0x1000, scoped, tag = 'scratch operand']
  #allocation3 [shape = 's32[1]{0}', space=sflag, size = 0x4, scoped, tag = 'scoped memory for tpu_custom_call.1']
  #allocation4 [shape = 'u8[1024]{0}', space=smem, size = 0x400, scoped, tag = 'prefetched SMEM operand 0']
  %s0 = inlined_call_operand.vmem [shape: s32[2,8], index: 0, kind: input, shape index: {}]
  %s1 = inlined_call_operand.vmem [shape: f32[2,256,4], index: 1, kind: input, shape index: {}]
  %s2 = inlined_call_operand.vmem [shape: f32[2,8,1], index: 2, kind: input, shape index: {}]
  %s3 = inlined_call_operand.vmem [shape: f32[2,8,4], index: 3, kind: input, shape index: {}]
  %s4 = inlined_call_operand.hbm [shape: f32[2,1,128], index: 4, kind: output, shape index: {}]
  %s5 = sld [smem:[#allocation0]]
  $region45: #{tpu_custom_call.1} parent=0
    _
  %s7 = ssub.s32 1, %s5
  %s8 = scalar_select 0, %s7, %s5
  %s9 = sshll.u32 %s0, 4
  %s10 = int_to_ptr.vmem [resolvable:$true] %s9
  %12 = dma.vmem_to_smem %s10, 32, [#allocation4], [#allocation3]
  %13 = dma.done [#allocation3], 32
  %14 = sfence
  $region1: #{tpu_custom_call.1} parent=0
    #allocation5 [shape = 'u8[1024]{0}', space=vmem, size = 0x400, scoped, tag = 'output window, operand 0']
    #allocation6 [shape = 's32[2]{0}', space=sflag, size = 0x8, scoped, tag = 'scoped memory for tpu_custom_call.1']
    %15 = vsyncpa [#allocation6], 0
    %s16 = scalar_lea.sflag [#allocation6], 1
    %17 = vsyncpa %s16, 0
    loop: start=0, step=1, limit=4
    $region2: #{tpu_custom_call.1} parent=1 // loop_pre_header
      _
    $region3: #{tpu_custom_call.1} parent=1 // loop_header
      %s19 = sphi 0, %s23
      %p20 = scmp.ge.s32.totalorder %s19, 4
      %s29 = sphi 0, %s31
      %s32 = sphi 0, %s29
      %s33 = sphi 0, %s32
      %s49 = sphi 0, %s33
      %s55 = sphi 0, %s57
      %s58 = sphi 0, %s55
      %s59 = sphi 0, %s58
      %s75 = sphi 0, %s59
      %s81 = sphi 0, %s83
      %s84 = sphi 0, %s81
      %s85 = sphi 0, %s84
      %s101 = sphi 0, %s85
      %s107 = sphi 0, %s109
      %s110 = sphi 0, %s107
      %s111 = sphi 0, %s110
      %s127 = sphi 0, %s111
    $region4: #{tpu_custom_call.1} parent=1 // loop_header_branch
      %22 = sbr.rel (%p20) target = $region8
    $region5: #{tpu_custom_call.1} parent=1 // loop_body
      %s24 = ssub.s32 %s19, 1
      %s25 = ssub.s32 %s19, 2
      %s26 = sadd.s32 %s19, 1
      %s27 = ssub.s32 %s19, %s26
      %p28 = scmp.eq.s32.totalorder %s27, 0
      %s30 = sadd.s32 %s29, 1
      %s31 = scalar_select %p28, %s29, %s30
      %p34 = pneg %p28
      %p35 = scmp.eq.s32.totalorder %s19, 1
      %p36 = por %p34, %p35
      %p37 = scmp.ne.s32.totalorder %s29, %s32
      %p38 = scmp.eq.s32.totalorder %s19, 0
      %p39 = por %p37, %p38
      %p40 = scmp.ne.s32.totalorder %s29, %s32
      %p41 = scmp.eq.s32.totalorder %s24, 1
      %p42 = por %p40, %p41
      %p43 = scmp.ne.s32.totalorder %s32, %s33
      %p44 = scmp.eq.s32.totalorder %s24, 0
      %p45 = por %p43, %p44
      %p46 = scmp.ne.s32.totalorder %s32, %s33
      %p47 = scmp.eq.s32.totalorder %s25, 1
      %p48 = por %p46, %p47
      %p50 = scmp.ne.s32.totalorder %s33, %s49
      %p51 = scmp.eq.s32.totalorder %s25, 0
      %p52 = por %p50, %p51
      %s53 = ssub.s32 %s19, %s26
      %p54 = scmp.eq.s32.totalorder %s53, 0
      %s56 = sadd.s32 %s55, 1
      %s57 = scalar_select %p54, %s55, %s56
      %p60 = pneg %p54
      %p61 = scmp.eq.s32.totalorder %s19, 1
      %p62 = por %p60, %p61
      %p63 = scmp.ne.s32.totalorder %s55, %s58
      %p64 = scmp.eq.s32.totalorder %s19, 0
      %p65 = por %p63, %p64
      %p66 = scmp.ne.s32.totalorder %s55, %s58
      %p67 = scmp.eq.s32.totalorder %s24, 1
      %p68 = por %p66, %p67
      %p69 = scmp.ne.s32.totalorder %s58, %s59
      %p70 = scmp.eq.s32.totalorder %s24, 0
      %p71 = por %p69, %p70
      %p72 = scmp.ne.s32.totalorder %s58, %s59
      %p73 = scmp.eq.s32.totalorder %s25, 1
      %p74 = por %p72, %p73
      %p76 = scmp.ne.s32.totalorder %s59, %s75
      %p77 = scmp.eq.s32.totalorder %s25, 0
      %p78 = por %p76, %p77
      %s79 = ssub.s32 %s19, %s26
      %p80 = scmp.eq.s32.totalorder %s79, 0
      %s82 = sadd.s32 %s81, 1
      %s83 = scalar_select %p80, %s81, %s82
      %p86 = pneg %p80
      %p87 = scmp.eq.s32.totalorder %s19, 1
      %p88 = por %p86, %p87
      %p89 = scmp.ne.s32.totalorder %s81, %s84
      %p90 = scmp.eq.s32.totalorder %s19, 0
      %p91 = por %p89, %p90
      %p92 = scmp.ne.s32.totalorder %s81, %s84
      %p93 = scmp.eq.s32.totalorder %s24, 1
      %p94 = por %p92, %p93
      %p95 = scmp.ne.s32.totalorder %s84, %s85
      %p96 = scmp.eq.s32.totalorder %s24, 0
      %p97 = por %p95, %p96
      %p98 = scmp.ne.s32.totalorder %s84, %s85
      %p99 = scmp.eq.s32.totalorder %s25, 1
      %p100 = por %p98, %p99
      %p102 = scmp.ne.s32.totalorder %s85, %s101
      %p103 = scmp.eq.s32.totalorder %s25, 0
      %p104 = por %p102, %p103
      %s105 = ssub.s32 %s19, %s26
      %p106 = scmp.eq.s32.totalorder %s105, 0
      %s108 = sadd.s32 %s107, 1
      %s109 = scalar_select %p106, %s107, %s108
      %p112 = pneg %p106
      %p113 = scmp.eq.s32.totalorder %s19, 1
      %p114 = por %p112, %p113
      %p115 = scmp.ne.s32.totalorder %s107, %s110
      %p116 = scmp.eq.s32.totalorder %s19, 0
      %p117 = por %p115, %p116
      %p118 = scmp.ne.s32.totalorder %s107, %s110
      %p119 = scmp.eq.s32.totalorder %s24, 1
      %p120 = por %p118, %p119
      %p121 = scmp.ne.s32.totalorder %s110, %s111
      %p122 = scmp.eq.s32.totalorder %s24, 0
      %p123 = por %p121, %p122
      %p124 = scmp.ne.s32.totalorder %s110, %s111
      %p125 = scmp.eq.s32.totalorder %s25, 1
      %p126 = por %p124, %p125
      %p128 = scmp.ne.s32.totalorder %s111, %s127
      %p129 = scmp.eq.s32.totalorder %s25, 0
      %p130 = por %p128, %p129
      %p131 = scmp.le.s32.totalorder 1, %s19
      %p132 = scmp.lt.s32.totalorder %s19, 3
      %p133 = pnand %p131, %p132
      %p134 = pneg %p133
      // Predicated region
      $region9: #{tpu_custom_call.1} parent=5 // pred_check
        _
      $region10: #{tpu_custom_call.1} parent=5 // pred_check_branch
        %136 = sbr.rel (%p133) target = $region12
      $region11: #{tpu_custom_call.1} parent=5 // pred_region
        %s137 = ssub.s32 %s19, 1
      $region12: #{tpu_custom_call.1} parent=5 // pred_fallthru
        _
      %p138 = scmp.lt.s32.totalorder %s19, 2
      // Predicated region
      $region13: #{tpu_custom_call.1} parent=5 // pred_check
        %p139 = pneg %p138
      $region14: #{tpu_custom_call.1} parent=5 // pred_check_branch
        %141 = sbr.rel (%p139) target = $region16
      $region15: #{tpu_custom_call.1} parent=5 // pred_region
        // Predicated region
        $region17: #{tpu_custom_call.1} parent=15 // pred_check
          %p142 = pneg %p39
        $region18: #{tpu_custom_call.1} parent=15 // pred_check_branch
          %144 = sbr.rel (%p142) target = $region20
        $region19: #{tpu_custom_call.1} parent=15 // pred_region
          %p145 = scmp.lt.s32.totalorder %s19, 1
          %s146 = scalar_select %p145, %s19, 1
          %s147 = smul.addr %s146, 32
          %s148 = smul.addr %s147, 8
          %s149 = scalar_lea.vmem %s1, %s148
        $region20: #{tpu_custom_call.1} parent=15 // pred_fallthru
          _
        // Predicated region
        $region21: #{tpu_custom_call.1} parent=15 // pred_check
          %p150 = pneg %p65
        $region22: #{tpu_custom_call.1} parent=15 // pred_check_branch
          %152 = sbr.rel (%p150) target = $region24
        $region23: #{tpu_custom_call.1} parent=15 // pred_region
          %p153 = scmp.lt.s32.totalorder %s19, 1
          %s154 = scalar_select %p153, %s19, 1
          %s155 = smul.addr %s154, 8
          %s156 = scalar_lea.vmem %s2, %s155
        $region24: #{tpu_custom_call.1} parent=15 // pred_fallthru
          _
        // Predicated region
        $region25: #{tpu_custom_call.1} parent=15 // pred_check
          %p157 = pneg %p91
        $region26: #{tpu_custom_call.1} parent=15 // pred_check_branch
          %159 = sbr.rel (%p157) target = $region28
        $region27: #{tpu_custom_call.1} parent=15 // pred_region
          %p160 = scmp.lt.s32.totalorder %s19, 1
          %s161 = scalar_select %p160, %s19, 1
          %s162 = smul.addr %s161, 8
          %s163 = scalar_lea.vmem %s3, %s162
        $region28: #{tpu_custom_call.1} parent=15 // pred_fallthru
          _
      $region16: #{tpu_custom_call.1} parent=5 // pred_fallthru
        _
      %p164 = scmp.le.s32.totalorder 1, %s19
      %p165 = scmp.lt.s32.totalorder %s19, 3
      %p166 = pnand %p164, %p165
      %p167 = pneg %p166
      // Predicated region
      $region29: #{tpu_custom_call.1} parent=5 // pred_check
        _
      $region30: #{tpu_custom_call.1} parent=5 // pred_check_branch
        %169 = sbr.rel (%p166) target = $region32
      $region31: #{tpu_custom_call.1} parent=5 // pred_region
        %s170 = ssub.s32 %s19, 1
        %p171 = scmp.lt.s32.totalorder %s24, 1
        %s172 = scalar_select %p171, %s24, 1
        %s173 = smul.addr %s172, 32
        %s174 = smul.addr %s173, 8
        %s175 = scalar_lea.vmem %s1, %s174
        %p176 = pneg %p45
        %p177 = pneg %p42
        %p178 = scmp.lt.s32.totalorder %s24, 1
        %s179 = scalar_select %p178, %s24, 1
        %s180 = smul.addr %s179, 8
        %s181 = scalar_lea.vmem %s2, %s180
        %p182 = pneg %p71
        %p183 = pneg %p68
        %p184 = scmp.lt.s32.totalorder %s24, 1
        %s185 = scalar_select %p184, %s24, 1
        %s186 = smul.addr %s185, 8
        %s187 = scalar_lea.vmem %s3, %s186
        %p188 = pneg %p97
        %p189 = pneg %p94
        %p190 = pneg %p123
        %p191 = pneg %p120
        %s192 = sand.u32 %s110, 1
        %s193 = scalar_lea.sflag [#allocation6], %s192
        %s194 = sand.u32 %s110, 1
        %s195 = scalar_lea.vmem [#allocation5], %s194
        %p196 = scmp.lt.s32.totalorder %s24, 1
        %s197 = scalar_select %p196, %s24, 1
        %s198 = smul.addr %s197, 32
        %s199 = smul.addr %s198, 8
        %s200 = scalar_lea.vmem %s1, %s199
        %p201 = scmp.lt.s32.totalorder %s24, 1
        %s202 = scalar_select %p201, %s24, 1
        %s203 = smul.addr %s202, 8
        %s204 = scalar_lea.vmem %s2, %s203
        %p205 = scmp.lt.s32.totalorder %s24, 1
        %s206 = scalar_select %p205, %s24, 1
        %s207 = smul.addr %s206, 8
        %s208 = scalar_lea.vmem %s3, %s207
        %vm209 = vcmask 31744
        %210 = vst.msk [vmem:[#allocation2] sm:$0xff] %vm209, 0.0
        %s211 = smul.u32 %s24, 128
        %s212 = sld [smem:[#allocation4 + %s211]]
        %s213 = scalar_lea.vmem %s200, %s212
        %v214 = vld [vmem:[%s213] sm:$0x1]
        %vm215 = vcmask 24576
        %216 = vst.msk [vmem:[#allocation2] sm:$0x1] %vm215, %v214
        %s217 = sadd.s32 %s211, 1
        %s218 = sld [smem:[#allocation4 + %s217]]
        %s219 = scalar_lea.vmem %s200, %s218
        %v220 = vld [vmem:[%s219] sm:$0x1]
        %221 = vst.msk [vmem:[#allocation2 + $0x1] sm:$0x1] %vm215, %v220
        %s222 = sadd.s32 %s211, 2
        %s223 = sld [smem:[#allocation4 + %s222]]
        %s224 = scalar_lea.vmem %s200, %s223
        %v225 = vld [vmem:[%s224] sm:$0x1]
        %226 = vst.msk [vmem:[#allocation2 + $0x2] sm:$0x1] %vm215, %v225
        %s227 = sadd.s32 %s211, 3
        %s228 = sld [smem:[#allocation4 + %s227]]
        %s229 = scalar_lea.vmem %s200, %s228
        %v230 = vld [vmem:[%s229] sm:$0x1]
        %231 = vst.msk [vmem:[#allocation2 + $0x3] sm:$0x1] %vm215, %v230
        %s232 = sadd.s32 %s211, 4
        %s233 = sld [smem:[#allocation4 + %s232]]
        %s234 = scalar_lea.vmem %s200, %s233
        %v235 = vld [vmem:[%s234] sm:$0x1]
        %236 = vst.msk [vmem:[#allocation2 + $0x4] sm:$0x1] %vm215, %v235
        %s237 = sadd.s32 %s211, 5
        %s238 = sld [smem:[#allocation4 + %s237]]
        %s239 = scalar_lea.vmem %s200, %s238
        %v240 = vld [vmem:[%s239] sm:$0x1]
        %241 = vst.msk [vmem:[#allocation2 + $0x5] sm:$0x1] %vm215, %v240
        %s242 = sadd.s32 %s211, 6
        %s243 = sld [smem:[#allocation4 + %s242]]
        %s244 = scalar_lea.vmem %s200, %s243
        %v245 = vld [vmem:[%s244] sm:$0x1]
        %246 = vst.msk [vmem:[#allocation2 + $0x6] sm:$0x1] %vm215, %v245
        %s247 = sadd.s32 %s211, 7
        %s248 = sld [smem:[#allocation4 + %s247]]
        %s249 = scalar_lea.vmem %s200, %s248
        %v250 = vld [vmem:[%s249] sm:$0x1]
        %251 = vst.msk [vmem:[#allocation2 + $0x7] sm:$0x1] %vm215, %v250
        %v252 = vld [vmem:[#allocation2] sm:$0xff]
        %v253 = vld [vmem:[%s208] sm:$0xff]
        %v254 = vld [vmem:[%s204] sm:$0xff]
        %v255 = vsub.f32 %v252, %v253
        %v256 = vand.u32 2147483647, %v255
        %258 = vset.pattern.permute.xlu0 0
        %259 = vperm.xlu0 %258, %v254
        %v260 = vpop.permute.xlu0 %259
        %v262 = vmul.f32 %v260, %v256
        %v263 = vsel %vm209, %v262, 0.0
        %264 = vadd.xlane.f32.xlu0 %v263
        %v265 = vpop.xlane.xlu0 %264
        %v266 = vrot.slane %v265, 4
        %v267 = vadd.f32 %v265, %v266
        %v268 = vrot.slane %v267, 2
        %v269 = vadd.f32 %v267, %v268
        %v270 = vrot.slane %v269, 1
        %v271 = vadd.f32 %v269, %v270
        %s272 = vtos %v271
        %v273 = vstv %s272
        %274 = vst [vmem:[%s195] sm:$0x1] %v273
        %s275 = sand.u32 %s110, 1
        %s276 = scalar_lea.sflag [#allocation6], %s275
        %s277 = sand.u32 %s110, 1
        %s278 = scalar_lea.vmem [#allocation5], %s277
        // Predicated region
        $region33: #{tpu_custom_call.1} parent=31 // pred_check
          %p279 = pneg %p120
        $region34: #{tpu_custom_call.1} parent=31 // pred_check_branch
          %281 = sbr.rel (%p279) target = $region36
        $region35: #{tpu_custom_call.1} parent=31 // pred_region
          %s283 = ssub.s32 16, 16
          %284 = vsyncadd %s276, %s283
          %s285 = smul.addr %s24, 16
          %s286 = scalar_lea.hbm %s4, %s285
          %s288 = sshll.u32 %s278, 4
          %s289 = int_to_ptr.vmem [resolvable:$true] %s288
          %291 = dma.vmem_to_hbm [thread:$0]  %s289, 16, %s286, %s276
        $region36: #{tpu_custom_call.1} parent=31 // pred_fallthru
          _
      $region32: #{tpu_custom_call.1} parent=5 // pred_fallthru
        _
      %p292 = scmp.le.s32.totalorder 2, %s19
      // Predicated region
      $region37: #{tpu_custom_call.1} parent=5 // pred_check
        %p293 = pneg %p292
      $region38: #{tpu_custom_call.1} parent=5 // pred_check_branch
        %295 = sbr.rel (%p293) target = $region40
      $region39: #{tpu_custom_call.1} parent=5 // pred_region
        %s296 = ssub.s32 %s19, 2
        // Predicated region
        $region41: #{tpu_custom_call.1} parent=39 // pred_check
          %p297 = pneg %p126
        $region42: #{tpu_custom_call.1} parent=39 // pred_check_branch
          %299 = sbr.rel (%p297) target = $region44
        $region43: #{tpu_custom_call.1} parent=39 // pred_region
          %s300 = sand.u32 %s111, 1
          %s301 = scalar_lea.sflag [#allocation6], %s300
          %s302 = sand.u32 %s111, 1
          %s303 = scalar_lea.vmem [#allocation5], %s302
          %304 = dma.done %s301, 16
        $region44: #{tpu_custom_call.1} parent=39 // pred_fallthru
          _
      $region40: #{tpu_custom_call.1} parent=5 // pred_fallthru
        _
    $region6: #{tpu_custom_call.1} parent=1 // loop_footer
      %s23 = sadd.s32 1, %s19
    $region7: #{tpu_custom_call.1} parent=1 // loop_footer_branch
      %18 = sbr.rel target = $region3
    $region8: #{tpu_custom_call.1} parent=1 // loop_exit
      _
    %305 = vsyncpa [#allocation6], 1
    %s306 = scalar_lea.sflag [#allocation6], 1
    %307 = vsyncpa %s306, 1

</llo_original>
